<compile_context>
chip_gen: v7x
topology: tpu7x:2x2x1
jax: 0.10.0
libtpu: 0.0.40
codegen_flags: <defaults>
</compile_context>

<pallas_src>
import functools

import jax
import jax.numpy as jnp
from jax.experimental import pallas as pl
from jax.experimental.pallas import tpu as pltpu


def _round_up(x: int, m: int) -> int:
    return ((x + m - 1) // m) * m


# ---------------------------------------------------------------------------
# Fused MLP kernel: h = x; for each layer: h = act(h @ W_l + b_l); o = h
# ---------------------------------------------------------------------------
def _fused_mlp_kernel(x_ref, *refs, n_layers: int):
    # refs = (w0, b0, w1, b1, ..., w_{L-1}, b_{L-1}, o_ref)
    o_ref = refs[-1]
    h = x_ref[...]
    for l in range(n_layers):
        w = refs[2 * l][...]
        b = refs[2 * l + 1][...]
        h = jnp.dot(h, w, preferred_element_type=jnp.float32) + b
        if l < n_layers - 1:
            # LeakyReLU(0.1): max(y, 0.1*y) is exact for slope in (0, 1).
            h = jnp.maximum(h, 0.1 * h)
        else:
            h = jnp.tanh(h)  # EUP — effectively free, keep fused.
    o_ref[...] = h.astype(o_ref.dtype)


# ---------------------------------------------------------------------------
# Wrapper: padding, BlockSpecs, pallas_call
# ---------------------------------------------------------------------------
def generator_forward(params, x, image_size, *, batch_tile: int = 128):
    """x: (B, latent_dim) float32 -> (B, C, H, W) float32."""
    B, K0 = x.shape
    n_layers = len(params)

    # --- pad every layer's (in, out) feature dims up to multiples of 128 ----
    in_dims = [K0] + [w.shape[1] for w, _ in params[:-1]]
    out_dims = [w.shape[1] for w, _ in params]
    in_p = [_round_up(d, 128) for d in in_dims]
    out_p = [_round_up(d, 128) for d in out_dims]

    padded_wb = []
    for l, (w, b) in enumerate(params):
        wp = (
            jnp.zeros((in_p[l], out_p[l]), jnp.float32)
            .at[: w.shape[0], : w.shape[1]]
            .set(w.astype(jnp.float32))
        )
        bp = jnp.zeros((1, out_p[l]), jnp.float32).at[0, : b.shape[0]].set(
            b.astype(jnp.float32)
        )
        padded_wb.extend([wp, bp])

    # --- batch tiling: TB rows per grid step, batch padded to multiple of TB -
    TB = min(batch_tile, _round_up(B, 8))
    Bp = _round_up(B, TB)
    xp = jnp.zeros((Bp, in_p[0]), jnp.float32).at[:B, :K0].set(x.astype(jnp.float32))

    Nout = out_p[-1]
    grid = (Bp // TB,)

    # VMEM budget sanity: whole (padded) weights + double-buffered x/o tiles.
    weight_bytes = sum(int(a.size) * 4 for a in padded_wb)
    io_bytes = 2 * 2 * TB * (in_p[0] + Nout) * 4
    assert weight_bytes + io_bytes < 24 * 1024 * 1024, (
        "weights too large for whole-block residency"
    )
    # TODO(synk): when layer weights outgrow VMEM (realistic GAN sizes), tile N
    # with a k-reduction grid axis ("arbitrary") + f32 acc scratch instead of
    # whole-(K,N) weight blocks, and consider bf16 weights on v6e/v7x.

    in_specs = [pl.BlockSpec((TB, in_p[0]), lambda i: (i, 0))]
    for l in range(n_layers):
        in_specs.append(pl.BlockSpec((in_p[l], out_p[l]), lambda i: (0, 0)))
        in_specs.append(pl.BlockSpec((1, out_p[l]), lambda i: (0, 0)))
    out_spec = pl.BlockSpec((TB, Nout), lambda i: (i, 0))

    flops = int(sum(2 * Bp * in_p[l] * out_p[l] for l in range(n_layers)))
    bytes_accessed = int(xp.size * 4 + weight_bytes + Bp * Nout * 4)
    cost = pl.CostEstimate(
        flops=flops, transcendentals=int(Bp * Nout), bytes_accessed=bytes_accessed
    )

    kernel = functools.partial(_fused_mlp_kernel, n_layers=n_layers)

    out_padded = pl.pallas_call(
        kernel,
        out_shape=jax.ShapeDtypeStruct((Bp, Nout), jnp.float32),
        grid=grid,
        in_specs=in_specs,
        out_specs=out_spec,
        compiler_params=pltpu.CompilerParams(
            dimension_semantics=("parallel",),
        ),
        cost_estimate=cost,
    )(xp, *padded_wb)

    out_dim = image_size[0] * image_size[1] * image_size[2]
    return out_padded[:B, :out_dim].reshape(B, *image_size)


# ---------------------------------------------------------------------------
# Parameter construction (mimics nn.Linear init) + pure-JAX reference
# ---------------------------------------------------------------------------
def init_generator_params(key, latent_dim, hidden_dim, image_size):
    output_dim = image_size[0] * image_size[1] * image_size[2]
    layer_in_dims = [latent_dim] + list(hidden_dim)
    layer_out_dims = list(hidden_dim) + [output_dim]
    params = []
    for in_dim, out_dim in zip(layer_in_dims, layer_out_dims):
        key, kw, kb = jax.random.split(key, 3)
        bound = 1.0 / (in_dim ** 0.5)
        # Stored as (in_dim, out_dim) so the kernel does x @ W directly.
        w = jax.random.uniform(kw, (in_dim, out_dim), jnp.float32, -bound, bound)
        b = jax.random.uniform(kb, (out_dim,), jnp.float32, -bound, bound)
        params.append((w, b))
    return params


def generator_forward_ref(params, x, image_size):
    B = x.shape[0]
    n_layers = len(params)
    h = x
    for idx, (w, b) in enumerate(params):
        is_last = idx == n_layers - 1
        h = h @ w + b
        if is_last:
            h = jnp.tanh(h)
        else:
            h = jnp.where(h >= 0.0, h, 0.1 * h)
    return h.reshape(B, *image_size)


if __name__ == "__main__":
    latent_dim = 32
    hidden_dim = [64, 128]
    image_size = (1, 16, 16)  # (C, H, W) -> output_dim = 256
    batch = 8

    key = jax.random.PRNGKey(0)
    key_params, key_x = jax.random.split(key)

    params = init_generator_params(key_params, latent_dim, hidden_dim, image_size)
    x = jax.random.normal(key_x, (batch, latent_dim), jnp.float32)

    out = generator_forward(params, x, image_size)
    out = jax.block_until_ready(out)

    ref = generator_forward_ref(params, x, image_size)
    assert out.shape == (batch, *image_size), out.shape
    err = float(jnp.max(jnp.abs(out - ref)))
    assert jnp.allclose(out, ref, atol=1e-5, rtol=1e-5), err

    print("KERNEL_OK")
</pallas_src>

<mosaic_0001>
module attributes {stable_mosaic.version = 11 : i64} {
  func.func @_fused_mlp_kernel(%arg0: i32, %arg1: memref<8x128xf32, #tpu.memory_space<vmem>>, %arg2: memref<128x128xf32, #tpu.memory_space<vmem>>, %arg3: memref<1x128xf32, #tpu.memory_space<vmem>>, %arg4: memref<128x128xf32, #tpu.memory_space<vmem>>, %arg5: memref<1x128xf32, #tpu.memory_space<vmem>>, %arg6: memref<128x256xf32, #tpu.memory_space<vmem>>, %arg7: memref<1x256xf32, #tpu.memory_space<vmem>>, %arg8: memref<8x256xf32, #tpu.memory_space<vmem>>) attributes {dimension_semantics = [#tpu.dimension_semantics<parallel>], iteration_bounds = array<i64: 1>, scalar_prefetch = 0 : i64, scratch_operands = 0 : i64, tpu.core_type = #tpu.core_type<tc>, window_params = [{transform_indices = @transform_0, window_bounds = array<i64: 8, 128>}, {pipeline_mode = #tpu.pipeline_mode<synchronous>, transform_indices = @transform_1, window_bounds = array<i64: 128, 128>}, {pipeline_mode = #tpu.pipeline_mode<synchronous>, transform_indices = @transform_2, window_bounds = array<i64: 1, 128>}, {pipeline_mode = #tpu.pipeline_mode<synchronous>, transform_indices = @transform_3, window_bounds = array<i64: 128, 128>}, {pipeline_mode = #tpu.pipeline_mode<synchronous>, transform_indices = @transform_4, window_bounds = array<i64: 1, 128>}, {pipeline_mode = #tpu.pipeline_mode<synchronous>, transform_indices = @transform_5, window_bounds = array<i64: 128, 256>}, {pipeline_mode = #tpu.pipeline_mode<synchronous>, transform_indices = @transform_6, window_bounds = array<i64: 1, 256>}, {transform_indices = @transform_7, window_bounds = array<i64: 8, 256>}]} {
    %c0 = arith.constant 0 : index
    %c0_0 = arith.constant 0 : index
    %0 = vector.load %arg1[%c0, %c0_0] : memref<8x128xf32, #tpu.memory_space<vmem>>, vector<8x128xf32>
    %c0_1 = arith.constant 0 : index
    %c0_2 = arith.constant 0 : index
    %1 = vector.load %arg2[%c0_1, %c0_2] : memref<128x128xf32, #tpu.memory_space<vmem>>, vector<128x128xf32>
    %c0_3 = arith.constant 0 : index
    %c0_4 = arith.constant 0 : index
    %2 = vector.load %arg3[%c0_3, %c0_4] : memref<1x128xf32, #tpu.memory_space<vmem>>, vector<1x128xf32>
    %cst = arith.constant dense<0.000000e+00> : vector<8x128xf32>
    %3 = tpu.matmul %0, %1, %cst {dimension_numbers = #tpu.dot_dimension_numbers<[1], [0], [0], [1], [0, 0, 1, 1], [], []>} : vector<8x128xf32>, vector<128x128xf32>, vector<8x128xf32> -> vector<8x128xf32>
    %4 = vector.broadcast %2 : vector<1x128xf32> to vector<8x128xf32>
    %5 = arith.addf %3, %4 : vector<8x128xf32>
    %cst_5 = arith.constant 1.000000e-01 : f32
    %6 = vector.broadcast %cst_5 : f32 to vector<8x128xf32>
    %7 = arith.mulf %6, %5 : vector<8x128xf32>
    %8 = arith.maximumf %5, %7 : vector<8x128xf32>
    %c0_6 = arith.constant 0 : index
    %c0_7 = arith.constant 0 : index
    %9 = vector.load %arg4[%c0_6, %c0_7] : memref<128x128xf32, #tpu.memory_space<vmem>>, vector<128x128xf32>
    %c0_8 = arith.constant 0 : index
    %c0_9 = arith.constant 0 : index
    %10 = vector.load %arg5[%c0_8, %c0_9] : memref<1x128xf32, #tpu.memory_space<vmem>>, vector<1x128xf32>
    %cst_10 = arith.constant dense<0.000000e+00> : vector<8x128xf32>
    %11 = tpu.matmul %8, %9, %cst_10 {dimension_numbers = #tpu.dot_dimension_numbers<[1], [0], [0], [1], [0, 0, 1, 1], [], []>} : vector<8x128xf32>, vector<128x128xf32>, vector<8x128xf32> -> vector<8x128xf32>
    %12 = vector.broadcast %10 : vector<1x128xf32> to vector<8x128xf32>
    %13 = arith.addf %11, %12 : vector<8x128xf32>
    %cst_11 = arith.constant 1.000000e-01 : f32
    %14 = vector.broadcast %cst_11 : f32 to vector<8x128xf32>
    %15 = arith.mulf %14, %13 : vector<8x128xf32>
    %16 = arith.maximumf %13, %15 : vector<8x128xf32>
    %c0_12 = arith.constant 0 : index
    %c0_13 = arith.constant 0 : index
    %17 = vector.load %arg6[%c0_12, %c0_13] : memref<128x256xf32, #tpu.memory_space<vmem>>, vector<128x256xf32>
    %c0_14 = arith.constant 0 : index
    %c0_15 = arith.constant 0 : index
    %18 = vector.load %arg7[%c0_14, %c0_15] : memref<1x256xf32, #tpu.memory_space<vmem>>, vector<1x256xf32>
    %cst_16 = arith.constant dense<0.000000e+00> : vector<8x256xf32>
    %19 = tpu.matmul %16, %17, %cst_16 {dimension_numbers = #tpu.dot_dimension_numbers<[1], [0], [0], [1], [0, 0, 1, 1], [], []>} : vector<8x128xf32>, vector<128x256xf32>, vector<8x256xf32> -> vector<8x256xf32>
    %20 = vector.broadcast %18 : vector<1x256xf32> to vector<8x256xf32>
    %21 = arith.addf %19, %20 : vector<8x256xf32>
    %22 = math.tanh %21 : vector<8x256xf32>
    %c0_17 = arith.constant 0 : index
    %c0_18 = arith.constant 0 : index
    %23 = vector.load %arg8[%c0_17, %c0_18] : memref<8x256xf32, #tpu.memory_space<vmem>>, vector<8x256xf32>
    tpu.vector_store %arg8[%c0_17, %c0_18], %22 {strides = array<i32>} : memref<8x256xf32, #tpu.memory_space<vmem>>, vector<8x256xf32>,
    return
  }
  func.func @transform_0(%arg0: i32) -> (i32, i32) {
    %c0_i32 = arith.constant 0 : i32
    %c0_i32_0 = arith.constant 0 : i32
    return %arg0, %c0_i32 : i32, i32
  }
  func.func @transform_1(%arg0: i32) -> (i32, i32) {
    %c0_i32 = arith.constant 0 : i32
    %c0_i32_0 = arith.constant 0 : i32
    %c0_i32_1 = arith.constant 0 : i32
    return %c0_i32, %c0_i32_0 : i32, i32
  }
  func.func @transform_2(%arg0: i32) -> (i32, i32) {
    %c0_i32 = arith.constant 0 : i32
    %c0_i32_0 = arith.constant 0 : i32
    %c0_i32_1 = arith.constant 0 : i32
    return %c0_i32, %c0_i32_0 : i32, i32
  }
  func.func @transform_3(%arg0: i32) -> (i32, i32) {
    %c0_i32 = arith.constant 0 : i32
    %c0_i32_0 = arith.constant 0 : i32
    %c0_i32_1 = arith.constant 0 : i32
    return %c0_i32, %c0_i32_0 : i32, i32
  }
  func.func @transform_4(%arg0: i32) -> (i32, i32) {
    %c0_i32 = arith.constant 0 : i32
    %c0_i32_0 = arith.constant 0 : i32
    %c0_i32_1 = arith.constant 0 : i32
    return %c0_i32, %c0_i32_0 : i32, i32
  }
  func.func @transform_5(%arg0: i32) -> (i32, i32) {
    %c0_i32 = arith.constant 0 : i32
    %c0_i32_0 = arith.constant 0 : i32
    %c0_i32_1 = arith.constant 0 : i32
    return %c0_i32, %c0_i32_0 : i32, i32
  }
  func.func @transform_6(%arg0: i32) -> (i32, i32) {
    %c0_i32 = arith.constant 0 : i32
    %c0_i32_0 = arith.constant 0 : i32
    %c0_i32_1 = arith.constant 0 : i32
    return %c0_i32, %c0_i32_0 : i32, i32
  }
  func.func @transform_7(%arg0: i32) -> (i32, i32) {
    %c0_i32 = arith.constant 0 : i32
    %c0_i32_0 = arith.constant 0 : i32
    return %arg0, %c0_i32 : i32, i32
  }
}

</mosaic_0001>

<llo_original>
// kernel: tpu_custom_call.1
$region0: #{tpu_custom_call.1}
  #allocation0 [shape = 'u32[]', space=smem, size = 0x4, offset = 0x4, fixed_abs, tag = 'smem constant byte address 0x4 - core index']
  #allocation1 [shape = 'u32[144,128]{1,0:T(1,128)}', space=vmem, size = 0x12000, scoped, tag = 'internal scratch']
  %s0 = inlined_call_operand.hbm [shape: f32[8,128], index: 0, kind: input, shape index: {}]
  %s1 = inlined_call_operand.hbm [shape: f32[128,128], index: 1, kind: input, shape index: {}]
  %s2 = inlined_call_operand.vmem [shape: f32[1,128], index: 2, kind: input, shape index: {}]
  %s3 = inlined_call_operand.hbm [shape: f32[128,128], index: 3, kind: input, shape index: {}]
  %s4 = inlined_call_operand.vmem [shape: f32[1,128], index: 4, kind: input, shape index: {}]
  %s5 = inlined_call_operand.hbm [shape: f32[128,256], index: 5, kind: input, shape index: {}]
  %s6 = inlined_call_operand.vmem [shape: f32[1,256], index: 6, kind: input, shape index: {}]
  %s7 = inlined_call_operand.hbm [shape: f32[8,256], index: 7, kind: output, shape index: {}]
  %s8 = sld [smem:[#allocation0]]
  $region54: #{tpu_custom_call.1} parent=0
    _
  %s10 = ssub.s32 1, %s8
  %s11 = scalar_select 0, %s10, %s8
  $region1: #{tpu_custom_call.1} parent=0
    #allocation2 [shape = 'u8[4096]{0}', space=vmem, size = 0x1000, scoped, tag = 'input window, operand 0, single buffered']
    #allocation3 [shape = 's32[1]{0}', space=sflag, size = 0x4, scoped, tag = 'scoped memory for tpu_custom_call.1']
    #allocation4 [shape = 's32[1]{0}', space=sflag, size = 0x4, scoped, tag = 'scoped memory for tpu_custom_call.1']
    #allocation5 [shape = 'u8[65536]{0}', space=vmem, size = 0x10000, scoped, tag = 'input window, operand 1, single buffered']
    #allocation6 [shape = 's32[1]{0}', space=sflag, size = 0x4, scoped, tag = 'scoped memory for tpu_custom_call.1']
    #allocation7 [shape = 'u8[65536]{0}', space=vmem, size = 0x10000, scoped, tag = 'input window, operand 3, single buffered']
    #allocation8 [shape = 'u8[131072]{0}', space=vmem, size = 0x20000, scoped, tag = 'input window, operand 5, single buffered']
    #allocation9 [shape = 's32[1]{0}', space=sflag, size = 0x4, scoped, tag = 'scoped memory for tpu_custom_call.1']
    #allocation10 [shape = 'u8[8192]{0}', space=vmem, size = 0x2000, scoped, tag = 'output window, operand 0, single buffered']
    %12 = vsyncpa [#allocation3], 0
    %13 = vsyncpa [#allocation6], 0
    %14 = vsyncpa [#allocation9], 0
    %15 = vsyncpa [#allocation4], 0
    // Predicated region
    $region2: #{tpu_custom_call.1} parent=1 // pred_check
      _
    $region3: #{tpu_custom_call.1} parent=1 // pred_check_branch
      %17 = sbr.rel (0) target = $region5
    $region4: #{tpu_custom_call.1} parent=1 // pred_region
      %s19 = ssub.s32 128, 128
      %20 = vsyncadd [#allocation3], %s19
      %s22 = sshll.u32 [#allocation2], 4
      %s23 = int_to_ptr.vmem [resolvable:$true] %s22
      %25 = dma.hbm_to_vmem [thread:$0]  %s0, 128, %s23, [#allocation3]
    $region5: #{tpu_custom_call.1} parent=1 // pred_fallthru
      _
    // Predicated region
    $region6: #{tpu_custom_call.1} parent=1 // pred_check
      _
    $region7: #{tpu_custom_call.1} parent=1 // pred_check_branch
      %27 = sbr.rel (0) target = $region9
    $region8: #{tpu_custom_call.1} parent=1 // pred_region
      %s29 = ssub.s32 2048, 2048
      %30 = vsyncadd [#allocation6], %s29
      %s31 = sshll.u32 [#allocation5], 4
      %s32 = int_to_ptr.vmem [resolvable:$true] %s31
      %37 = dma.hbm_to_vmem [thread:$0]  %s1, 2048, %s32, [#allocation6], 128, 128, 8
    $region9: #{tpu_custom_call.1} parent=1 // pred_fallthru
      _
    // Predicated region
    $region10: #{tpu_custom_call.1} parent=1 // pred_check
      _
    $region11: #{tpu_custom_call.1} parent=1 // pred_check_branch
      %39 = sbr.rel (0) target = $region13
    $region12: #{tpu_custom_call.1} parent=1 // pred_region
      _
    $region13: #{tpu_custom_call.1} parent=1 // pred_fallthru
      _
    // Predicated region
    $region14: #{tpu_custom_call.1} parent=1 // pred_check
      _
    $region15: #{tpu_custom_call.1} parent=1 // pred_check_branch
      %41 = sbr.rel (0) target = $region17
    $region16: #{tpu_custom_call.1} parent=1 // pred_region
      %s43 = ssub.s32 2048, 2048
      %44 = vsyncadd [#allocation6], %s43
      %s45 = sshll.u32 [#allocation7], 4
      %s46 = int_to_ptr.vmem [resolvable:$true] %s45
      %51 = dma.hbm_to_vmem [thread:$0]  %s3, 2048, %s46, [#allocation6], 128, 128, 8
    $region17: #{tpu_custom_call.1} parent=1 // pred_fallthru
      _
    // Predicated region
    $region18: #{tpu_custom_call.1} parent=1 // pred_check
      _
    $region19: #{tpu_custom_call.1} parent=1 // pred_check_branch
      %53 = sbr.rel (0) target = $region21
    $region20: #{tpu_custom_call.1} parent=1 // pred_region
      _
    $region21: #{tpu_custom_call.1} parent=1 // pred_fallthru
      _
    // Predicated region
    $region22: #{tpu_custom_call.1} parent=1 // pred_check
      _
    $region23: #{tpu_custom_call.1} parent=1 // pred_check_branch
      %55 = sbr.rel (0) target = $region25
    $region24: #{tpu_custom_call.1} parent=1 // pred_region
      %s57 = ssub.s32 4096, 4096
      %58 = vsyncadd [#allocation9], %s57
      %s59 = sshll.u32 [#allocation8], 4
      %s60 = int_to_ptr.vmem [resolvable:$true] %s59
      %65 = dma.hbm_to_vmem [thread:$0]  %s5, 4096, %s60, [#allocation9], 256, 256, 16
    $region25: #{tpu_custom_call.1} parent=1 // pred_fallthru
      _
    // Predicated region
    $region26: #{tpu_custom_call.1} parent=1 // pred_check
      _
    $region27: #{tpu_custom_call.1} parent=1 // pred_check_branch
      %67 = sbr.rel (0) target = $region29
    $region28: #{tpu_custom_call.1} parent=1 // pred_region
      _
    $region29: #{tpu_custom_call.1} parent=1 // pred_fallthru
      _
    // Predicated region
    $region30: #{tpu_custom_call.1} parent=1 // pred_check
      _
    $region31: #{tpu_custom_call.1} parent=1 // pred_check_branch
      %69 = sbr.rel (0) target = $region33
    $region32: #{tpu_custom_call.1} parent=1 // pred_region
      %70 = dma.done [#allocation3], 128
    $region33: #{tpu_custom_call.1} parent=1 // pred_fallthru
      _
    // Predicated region
    $region34: #{tpu_custom_call.1} parent=1 // pred_check
      _
    $region35: #{tpu_custom_call.1} parent=1 // pred_check_branch
      %72 = sbr.rel (0) target = $region37
    $region36: #{tpu_custom_call.1} parent=1 // pred_region
      %73 = dma.done [#allocation6], 2048
    $region37: #{tpu_custom_call.1} parent=1 // pred_fallthru
      _
    // Predicated region
    $region38: #{tpu_custom_call.1} parent=1 // pred_check
      _
    $region39: #{tpu_custom_call.1} parent=1 // pred_check_branch
      %75 = sbr.rel (0) target = $region41
    $region40: #{tpu_custom_call.1} parent=1 // pred_region
      %76 = dma.done [#allocation6], 2048
    $region41: #{tpu_custom_call.1} parent=1 // pred_fallthru
      _
    // Predicated region
    $region42: #{tpu_custom_call.1} parent=1 // pred_check
      _
    $region43: #{tpu_custom_call.1} parent=1 // pred_check_branch
      %78 = sbr.rel (0) target = $region45
    $region44: #{tpu_custom_call.1} parent=1 // pred_region
      %79 = dma.done [#allocation9], 4096
    $region45: #{tpu_custom_call.1} parent=1 // pred_fallthru
      _
    %v80 = vld [vmem:[#allocation2] sm:$0xff]
    %v81 = vld [vmem:[#allocation5] sm:$0xff]
    %v82 = vld [vmem:[#allocation5 + $0x8] sm:$0xff]
    %v83 = vld [vmem:[#allocation5 + $0x10] sm:$0xff]
    %v84 = vld [vmem:[#allocation5 + $0x18] sm:$0xff]
    %v85 = vld [vmem:[#allocation5 + $0x20] sm:$0xff]
    %v86 = vld [vmem:[#allocation5 + $0x28] sm:$0xff]
    %v87 = vld [vmem:[#allocation5 + $0x30] sm:$0xff]
    %v88 = vld [vmem:[#allocation5 + $0x38] sm:$0xff]
    %v89 = vld [vmem:[#allocation5 + $0x40] sm:$0xff]
    %v90 = vld [vmem:[#allocation5 + $0x48] sm:$0xff]
    %v91 = vld [vmem:[#allocation5 + $0x50] sm:$0xff]
    %v92 = vld [vmem:[#allocation5 + $0x58] sm:$0xff]
    %v93 = vld [vmem:[#allocation5 + $0x60] sm:$0xff]
    %v94 = vld [vmem:[#allocation5 + $0x68] sm:$0xff]
    %v95 = vld [vmem:[#allocation5 + $0x70] sm:$0xff]
    %v96 = vld [vmem:[#allocation5 + $0x78] sm:$0xff]
    %v97 = vld [vmem:[%s2] sm:$0x1]
    %v99 = vlaneseq
    %v100 = vshrl.u32 %v99, 7
    %v101 = vsub.s32 0, %v100
    %v102 = vrot.slane %v97, %v101
    %104 = vmatprep.subr.mxu0 0.0
    %105 = vmatpush1.msra.mxu0 %v81
    %106 = vmatprep.subr.mxu0 0.0
    %107 = vmatpush1.msra.mxu0 %v82
    %108 = vmatprep.subr.mxu0 0.0
    %109 = vmatpush1.msra.mxu0 %v83
    %110 = vmatprep.subr.mxu0 0.0
    %111 = vmatpush1.msra.mxu0 %v84
    %112 = vmatprep.subr.mxu0 0.0
    %113 = vmatpush1.msra.mxu0 %v85
    %114 = vmatprep.subr.mxu0 0.0
    %115 = vmatpush1.msra.mxu0 %v86
    %116 = vmatprep.subr.mxu0 0.0
    %117 = vmatpush1.msra.mxu0 %v87
    %118 = vmatprep.subr.mxu0 0.0
    %119 = vmatpush1.msra.mxu0 %v88
    %120 = vmatprep.subr.mxu0 0.0
    %121 = vmatpush1.msra.mxu0 %v89
    %122 = vmatprep.subr.mxu0 0.0
    %123 = vmatpush1.msra.mxu0 %v90
    %124 = vmatprep.subr.mxu0 0.0
    %125 = vmatpush1.msra.mxu0 %v91
    %126 = vmatprep.subr.mxu0 0.0
    %127 = vmatpush1.msra.mxu0 %v92
    %128 = vmatprep.subr.mxu0 0.0
    %129 = vmatpush1.msra.mxu0 %v93
    %130 = vmatprep.subr.mxu0 0.0
    %131 = vmatpush1.msra.mxu0 %v94
    %132 = vmatprep.subr.mxu0 0.0
    %133 = vmatpush1.msra.mxu0 %v95
    %134 = vmatprep.subr.mxu0 0.0
    %135 = vmatpush1.msra.mxu0 %v96
    %136 = vmatprep.subr.mxu0 0.0
    %137 = vmatpush1.msra.mxu0 0.0
    %138 = vmatprep.subr.mxu0 0.0
    %139 = vmatpush1.msra.mxu0 0.0
    %140 = vmatprep.subr.mxu0 0.0
    %141 = vmatpush1.msra.mxu0 0.0
    %142 = vmatprep.subr.mxu0 0.0
    %143 = vmatpush1.msra.mxu0 0.0
    %144 = vmatprep.subr.mxu0 0.0
    %145 = vmatpush1.msra.mxu0 0.0
    %146 = vmatprep.subr.mxu0 0.0
    %147 = vmatpush1.msra.mxu0 0.0
    %148 = vmatprep.subr.mxu0 0.0
    %149 = vmatpush1.msra.mxu0 0.0
    %150 = vmatprep.subr.mxu0 0.0
    %151 = vmatpush1.msra.mxu0 0.0
    %152 = vmatprep.subr.mxu0 0.0
    %153 = vmatpush1.msra.mxu0 0.0
    %154 = vmatprep.subr.mxu0 0.0
    %155 = vmatpush1.msra.mxu0 0.0
    %156 = vmatprep.subr.mxu0 0.0
    %157 = vmatpush1.msra.mxu0 0.0
    %158 = vmatprep.subr.mxu0 0.0
    %159 = vmatpush1.msra.mxu0 0.0
    %160 = vmatprep.subr.mxu0 0.0
    %161 = vmatpush1.msra.mxu0 0.0
    %162 = vmatprep.subr.mxu0 0.0
    %163 = vmatpush1.msra.mxu0 0.0
    %164 = vmatprep.subr.mxu0 0.0
    %165 = vmatpush1.msra.mxu0 0.0
    %166 = vmatprep.subr.mxu0 0.0
    %167 = vmatpush1.msra.mxu0 0.0
    %168 = vmatprep.mubr.f32.mxu0 0.0
    %169 = vmatmul.mubr.f32.gmra.mrb[0].mxu0 %v80
    %v170 = vpop.f32.mrb[0].mxu0
    %v171 = vadd.f32 %v102, %v170
    %v172 = vpop.f32.mrb[0].mxu0
    %173 = vdwg.mxu0
    %v174 = vmul.f32 %v171, 0.1
    %v175 = vmax.f32 %v171, %v174
    %v176 = vld [vmem:[#allocation7] sm:$0xff]
    %v177 = vld [vmem:[#allocation7 + $0x8] sm:$0xff]
    %v178 = vld [vmem:[#allocation7 + $0x10] sm:$0xff]
    %v179 = vld [vmem:[#allocation7 + $0x18] sm:$0xff]
    %v180 = vld [vmem:[#allocation7 + $0x20] sm:$0xff]
    %v181 = vld [vmem:[#allocation7 + $0x28] sm:$0xff]
    %v182 = vld [vmem:[#allocation7 + $0x30] sm:$0xff]
    %v183 = vld [vmem:[#allocation7 + $0x38] sm:$0xff]
    %v184 = vld [vmem:[#allocation7 + $0x40] sm:$0xff]
    %v185 = vld [vmem:[#allocation7 + $0x48] sm:$0xff]
    %v186 = vld [vmem:[#allocation7 + $0x50] sm:$0xff]
    %v187 = vld [vmem:[#allocation7 + $0x58] sm:$0xff]
    %v188 = vld [vmem:[#allocation7 + $0x60] sm:$0xff]
    %v189 = vld [vmem:[#allocation7 + $0x68] sm:$0xff]
    %v190 = vld [vmem:[#allocation7 + $0x70] sm:$0xff]
    %v191 = vld [vmem:[#allocation7 + $0x78] sm:$0xff]
    %v192 = vld [vmem:[%s4] sm:$0x1]
    %v194 = vlaneseq
    %v195 = vshrl.u32 %v194, 7
    %v196 = vsub.s32 0, %v195
    %v197 = vrot.slane %v192, %v196
    %199 = vmatprep.subr.mxu0 0.0
    %200 = vmatpush1.msra.mxu0 %v176
    %201 = vmatprep.subr.mxu0 0.0
    %202 = vmatpush1.msra.mxu0 %v177
    %203 = vmatprep.subr.mxu0 0.0
    %204 = vmatpush1.msra.mxu0 %v178
    %205 = vmatprep.subr.mxu0 0.0
    %206 = vmatpush1.msra.mxu0 %v179
    %207 = vmatprep.subr.mxu0 0.0
    %208 = vmatpush1.msra.mxu0 %v180
    %209 = vmatprep.subr.mxu0 0.0
    %210 = vmatpush1.msra.mxu0 %v181
    %211 = vmatprep.subr.mxu0 0.0
    %212 = vmatpush1.msra.mxu0 %v182
    %213 = vmatprep.subr.mxu0 0.0
    %214 = vmatpush1.msra.mxu0 %v183
    %215 = vmatprep.subr.mxu0 0.0
    %216 = vmatpush1.msra.mxu0 %v184
    %217 = vmatprep.subr.mxu0 0.0
    %218 = vmatpush1.msra.mxu0 %v185
    %219 = vmatprep.subr.mxu0 0.0
    %220 = vmatpush1.msra.mxu0 %v186
    %221 = vmatprep.subr.mxu0 0.0
    %222 = vmatpush1.msra.mxu0 %v187
    %223 = vmatprep.subr.mxu0 0.0
    %224 = vmatpush1.msra.mxu0 %v188
    %225 = vmatprep.subr.mxu0 0.0
    %226 = vmatpush1.msra.mxu0 %v189
    %227 = vmatprep.subr.mxu0 0.0
    %228 = vmatpush1.msra.mxu0 %v190
    %229 = vmatprep.subr.mxu0 0.0
    %230 = vmatpush1.msra.mxu0 %v191
    %231 = vmatprep.subr.mxu0 0.0
    %232 = vmatpush1.msra.mxu0 0.0
    %233 = vmatprep.subr.mxu0 0.0
    %234 = vmatpush1.msra.mxu0 0.0
    %235 = vmatprep.subr.mxu0 0.0
    %236 = vmatpush1.msra.mxu0 0.0
    %237 = vmatprep.subr.mxu0 0.0
    %238 = vmatpush1.msra.mxu0 0.0
    %239 = vmatprep.subr.mxu0 0.0
    %240 = vmatpush1.msra.mxu0 0.0
    %241 = vmatprep.subr.mxu0 0.0
    %242 = vmatpush1.msra.mxu0 0.0
    %243 = vmatprep.subr.mxu0 0.0
    %244 = vmatpush1.msra.mxu0 0.0
    %245 = vmatprep.subr.mxu0 0.0
    %246 = vmatpush1.msra.mxu0 0.0
    %247 = vmatprep.subr.mxu0 0.0
    %248 = vmatpush1.msra.mxu0 0.0
    %249 = vmatprep.subr.mxu0 0.0
    %250 = vmatpush1.msra.mxu0 0.0
    %251 = vmatprep.subr.mxu0 0.0
    %252 = vmatpush1.msra.mxu0 0.0
    %253 = vmatprep.subr.mxu0 0.0
    %254 = vmatpush1.msra.mxu0 0.0
    %255 = vmatprep.subr.mxu0 0.0
    %256 = vmatpush1.msra.mxu0 0.0
    %257 = vmatprep.subr.mxu0 0.0
    %258 = vmatpush1.msra.mxu0 0.0
    %259 = vmatprep.subr.mxu0 0.0
    %260 = vmatpush1.msra.mxu0 0.0
    %261 = vmatprep.subr.mxu0 0.0
    %262 = vmatpush1.msra.mxu0 0.0
    %263 = vmatprep.mubr.f32.mxu0 0.0
    %264 = vmatmul.mubr.f32.gmra.mrb[0].mxu0 %v175
    %v265 = vpop.f32.mrb[0].mxu0
    %v266 = vadd.f32 %v197, %v265
    %v267 = vpop.f32.mrb[0].mxu0
    %268 = vdwg.mxu0
    %v269 = vmul.f32 %v266, 0.1
    %v270 = vmax.f32 %v266, %v269
    %v271 = vld [vmem:[#allocation8] sm:$0xff]
    %v272 = vld [vmem:[#allocation8 + $0x8] sm:$0xff]
    %v273 = vld [vmem:[#allocation8 + $0x10] sm:$0xff]
    %v274 = vld [vmem:[#allocation8 + $0x18] sm:$0xff]
    %v275 = vld [vmem:[#allocation8 + $0x20] sm:$0xff]
    %v276 = vld [vmem:[#allocation8 + $0x28] sm:$0xff]
    %v277 = vld [vmem:[#allocation8 + $0x30] sm:$0xff]
    %v278 = vld [vmem:[#allocation8 + $0x38] sm:$0xff]
    %v279 = vld [vmem:[#allocation8 + $0x40] sm:$0xff]
    %v280 = vld [vmem:[#allocation8 + $0x48] sm:$0xff]
    %v281 = vld [vmem:[#allocation8 + $0x50] sm:$0xff]
    %v282 = vld [vmem:[#allocation8 + $0x58] sm:$0xff]
    %v283 = vld [vmem:[#allocation8 + $0x60] sm:$0xff]
    %v284 = vld [vmem:[#allocation8 + $0x68] sm:$0xff]
    %v285 = vld [vmem:[#allocation8 + $0x70] sm:$0xff]
    %v286 = vld [vmem:[#allocation8 + $0x78] sm:$0xff]
    %v287 = vld [vmem:[#allocation8 + $0x80] sm:$0xff]
    %v288 = vld [vmem:[#allocation8 + $0x88] sm:$0xff]
    %v289 = vld [vmem:[#allocation8 + $0x90] sm:$0xff]
    %v290 = vld [vmem:[#allocation8 + $0x98] sm:$0xff]
    %v291 = vld [vmem:[#allocation8 + $0xa0] sm:$0xff]
    %v292 = vld [vmem:[#allocation8 + $0xa8] sm:$0xff]
    %v293 = vld [vmem:[#allocation8 + $0xb0] sm:$0xff]
    %v294 = vld [vmem:[#allocation8 + $0xb8] sm:$0xff]
    %v295 = vld [vmem:[#allocation8 + $0xc0] sm:$0xff]
    %v296 = vld [vmem:[#allocation8 + $0xc8] sm:$0xff]
    %v297 = vld [vmem:[#allocation8 + $0xd0] sm:$0xff]
    %v298 = vld [vmem:[#allocation8 + $0xd8] sm:$0xff]
    %v299 = vld [vmem:[#allocation8 + $0xe0] sm:$0xff]
    %v300 = vld [vmem:[#allocation8 + $0xe8] sm:$0xff]
    %v301 = vld [vmem:[#allocation8 + $0xf0] sm:$0xff]
    %v302 = vld [vmem:[#allocation8 + $0xf8] sm:$0xff]
    %v303 = vld [vmem:[%s6] sm:$0x3]
    %v305 = vlaneseq
    %v306 = vshrl.u32 %v305, 7
    %v307 = vsub.s32 0, %v306
    %v308 = vrot.slane %v303, %v307
    %v309 = vlaneseq
    %v310 = vshrl.u32 %v309, 7
    %v311 = vsub.s32 1, %v310
    %v312 = vrot.slane %v303, %v311
    %315 = vmatprep.subr.mxu0 %v272
    %316 = vmatpush1.msra.mxu0 %v271
    %317 = vmatprep.subr.mxu0 %v274
    %318 = vmatpush1.msra.mxu0 %v273
    %319 = vmatprep.subr.mxu0 %v276
    %320 = vmatpush1.msra.mxu0 %v275
    %321 = vmatprep.subr.mxu0 %v278
    %322 = vmatpush1.msra.mxu0 %v277
    %323 = vmatprep.subr.mxu0 %v280
    %324 = vmatpush1.msra.mxu0 %v279
    %325 = vmatprep.subr.mxu0 %v282
    %326 = vmatpush1.msra.mxu0 %v281
    %327 = vmatprep.subr.mxu0 %v284
    %328 = vmatpush1.msra.mxu0 %v283
    %329 = vmatprep.subr.mxu0 %v286
    %330 = vmatpush1.msra.mxu0 %v285
    %331 = vmatprep.subr.mxu0 %v288
    %332 = vmatpush1.msra.mxu0 %v287
    %333 = vmatprep.subr.mxu0 %v290
    %334 = vmatpush1.msra.mxu0 %v289
    %335 = vmatprep.subr.mxu0 %v292
    %336 = vmatpush1.msra.mxu0 %v291
    %337 = vmatprep.subr.mxu0 %v294
    %338 = vmatpush1.msra.mxu0 %v293
    %339 = vmatprep.subr.mxu0 %v296
    %340 = vmatpush1.msra.mxu0 %v295
    %341 = vmatprep.subr.mxu0 %v298
    %342 = vmatpush1.msra.mxu0 %v297
    %343 = vmatprep.subr.mxu0 %v300
    %344 = vmatpush1.msra.mxu0 %v299
    %345 = vmatprep.subr.mxu0 %v302
    %346 = vmatpush1.msra.mxu0 %v301
    %347 = vmatprep.subr.mxu0 0.0
    %348 = vmatpush1.msra.mxu0 0.0
    %349 = vmatprep.subr.mxu0 0.0
    %350 = vmatpush1.msra.mxu0 0.0
    %351 = vmatprep.subr.mxu0 0.0
    %352 = vmatpush1.msra.mxu0 0.0
    %353 = vmatprep.subr.mxu0 0.0
    %354 = vmatpush1.msra.mxu0 0.0
    %355 = vmatprep.subr.mxu0 0.0
    %356 = vmatpush1.msra.mxu0 0.0
    %357 = vmatprep.subr.mxu0 0.0
    %358 = vmatpush1.msra.mxu0 0.0
    %359 = vmatprep.subr.mxu0 0.0
    %360 = vmatpush1.msra.mxu0 0.0
    %361 = vmatprep.subr.mxu0 0.0
    %362 = vmatpush1.msra.mxu0 0.0
    %363 = vmatprep.subr.mxu0 0.0
    %364 = vmatpush1.msra.mxu0 0.0
    %365 = vmatprep.subr.mxu0 0.0
    %366 = vmatpush1.msra.mxu0 0.0
    %367 = vmatprep.subr.mxu0 0.0
    %368 = vmatpush1.msra.mxu0 0.0
    %369 = vmatprep.subr.mxu0 0.0
    %370 = vmatpush1.msra.mxu0 0.0
    %371 = vmatprep.subr.mxu0 0.0
    %372 = vmatpush1.msra.mxu0 0.0
    %373 = vmatprep.subr.mxu0 0.0
    %374 = vmatpush1.msra.mxu0 0.0
    %375 = vmatprep.subr.mxu0 0.0
    %376 = vmatpush1.msra.mxu0 0.0
    %377 = vmatprep.subr.mxu0 0.0
    %378 = vmatpush1.msra.mxu0 0.0
    %379 = vmatprep.mubr.f32.mxu0 0.0
    %380 = vmatmul.mubr.f32.gmra.mrb[0].mxu0 %v270
    %v381 = vpop.f32.mrb[0].mxu0
    %v382 = vadd.f32 %v308, %v381
    %v383 = vpop.f32.mrb[0].mxu0
    %v384 = vadd.f32 %v312, %v383
    %385 = vdwg.mxu0
    %v386 = vtanh.pop %v382
    %v387 = vtanh.pop %v384
    %388 = vst [vmem:[#allocation10] sm:$0xff] %v386
    %389 = vst [vmem:[#allocation10 + $0x8] sm:$0xff] %v387
    // Predicated region
    $region46: #{tpu_custom_call.1} parent=1 // pred_check
      _
    $region47: #{tpu_custom_call.1} parent=1 // pred_check_branch
      %391 = sbr.rel (0) target = $region49
    $region48: #{tpu_custom_call.1} parent=1 // pred_region
      %s393 = ssub.s32 256, 256
      %394 = vsyncadd [#allocation4], %s393
      %s396 = sshll.u32 [#allocation10], 4
      %s397 = int_to_ptr.vmem [resolvable:$true] %s396
      %399 = dma.vmem_to_hbm [thread:$0]  %s397, 256, %s7, [#allocation4]
    $region49: #{tpu_custom_call.1} parent=1 // pred_fallthru
      _
    // Predicated region
    $region50: #{tpu_custom_call.1} parent=1 // pred_check
      _
    $region51: #{tpu_custom_call.1} parent=1 // pred_check_branch
      %401 = sbr.rel (0) target = $region53
    $region52: #{tpu_custom_call.1} parent=1 // pred_region
      %402 = dma.done [#allocation4], 256
    $region53: #{tpu_custom_call.1} parent=1 // pred_fallthru
      _
    %403 = vsyncpa [#allocation3], 1
    %404 = vsyncpa [#allocation6], 1
    %405 = vsyncpa [#allocation9], 1
    %406 = vsyncpa [#allocation4], 1

</llo_original>
